<compile_context>
chip_gen: v6e
topology: v6e:2x2x1
jax: 0.10.0
libtpu: 0.0.40
codegen_flags: <defaults>
</compile_context>

<pallas_src>
import functools
import math

import jax
import jax.numpy as jnp
from jax.experimental import pallas as pl
from jax.experimental.pallas import tpu as pltpu

# ---------------- model hyper-parameters (match the nn.Module __init__) -----
N_INPUT = 4
N_HIDDEN = 32
N_OUTPUT = 4
N_LAYERS = 2
RES = True              # residual connections inside the hidden stack

# rows packed side-by-side along the 128-lane axis (requires 128 % n_hidden==0)
P = 128 // N_HIDDEN     # = 4


def _round_up(a, b):
    return ((a + b - 1) // b) * b


def _gelu(x, approximate=False):
    if approximate:
        # tanh approximation -> EUP slot (cheaper, ~1e-3 difference vs torch)
        c = 0.7978845608028654  # sqrt(2/pi)
        return 0.5 * x * (1.0 + jnp.tanh(c * (x + 0.044715 * x * x * x)))
    # nn.GELU() default: 0.5 * x * (1 + erf(x / sqrt(2)))
    return 0.5 * x * (1.0 + jax.lax.erf(x * 0.7071067811865476))


# ------------------------------- kernel -------------------------------------
def mlp_kernel(x_ref, w_pre_ref, w_h_ref, w_post_ref, b_stack_ref, b_post_ref,
               o_ref, *, approx_gelu):
    # x_ref:       (rt, P*n_input)   packed rows (P logical rows per sublane row)
    # w_pre_ref:   (P*n_input, 128)  block-diagonal replicas of W_pre
    # w_h_ref:     (L, 128, 128)     block-diagonal replicas of W_h[i]
    # w_post_ref:  (128, P*n_output) block-diagonal replicas of W_post
    # b_stack_ref: (L+1, 128)        [b_pre; b_h[0]; ...] tiled across groups
    # b_post_ref:  (1, P*n_output)   b_post tiled across groups
    act = functools.partial(_gelu, approximate=approx_gelu)

    xp = x_ref[...].astype(jnp.float32)

    # linear_pre + act  -> dense (rt, 128) hidden slab
    h = jnp.dot(xp, w_pre_ref[...], preferred_element_type=jnp.float32)
    h = act(h + b_stack_ref[0:1, :])

    # hidden residual stack (static unroll over n_layers)
    for i in range(N_LAYERS):
        z = jnp.dot(h, w_h_ref[i], preferred_element_type=jnp.float32)
        z = act(z + b_stack_ref[i + 1:i + 2, :])
        h = z + h if RES else z

    # linear_post (no activation), packed output (rt, P*n_output)
    out = jnp.dot(h, w_post_ref[...], preferred_element_type=jnp.float32)
    out = out + b_post_ref[...]
    o_ref[...] = out.astype(o_ref.dtype)


# ------------------------------- wrapper ------------------------------------
@functools.partial(jax.jit, static_argnames=("tm", "approx_gelu"))
def mlp_forward(x, params, *, tm=2048, approx_gelu=False):
    """x: (..., n_input) -> (..., n_output); same semantics as MLP.forward.

    tm = logical rows per grid step (internally rounded to a multiple of 64).
    """
    w_pre, b_pre, w_h, b_h, w_post, b_post = params

    lead_shape = x.shape[:-1]
    m = math.prod(lead_shape) if lead_shape else 1

    # ---- choose the row tile; pad M instead of asserting divisibility ------
    tm = int(tm)
    tm = min(tm, _round_up(m, 64))
    tm = max(64, _round_up(tm, 64))
    m_pad = _round_up(m, tm)
    if m_pad // tm == 1:
        # keep at least 2 grid steps so v7x's two TensorCores both engage
        tm //= 2
    grid_len = m_pad // tm
    rt = tm // P                      # packed rows per tile (multiple of 8)

    # ---- pack rows: (m, 4) -> (m_pad/P, P*4); free reshape on the HBM side --
    x2d = x.reshape(m, N_INPUT)
    if m_pad != m:
        x2d = jnp.pad(x2d, ((0, m_pad - m), (0, 0)))
    xp = x2d.reshape(m_pad // P, P * N_INPUT)

    # ---- block-diagonal ("lane packed") parameters --------------------------
    eye_p = jnp.eye(P, dtype=jnp.float32)
    w_pre_p = jnp.kron(eye_p, w_pre.astype(jnp.float32))        # (16, 128)
    w_h_p = jnp.stack([jnp.kron(eye_p, w_h[i].astype(jnp.float32))
                       for i in range(N_LAYERS)])               # (L, 128, 128)
    w_post_p = jnp.kron(eye_p, w_post.astype(jnp.float32))      # (128, 16)
    b_stack = jnp.concatenate(
        [jnp.tile(b_pre.astype(jnp.float32), (1, P)),
         jnp.tile(b_h[:, 0, :].astype(jnp.float32), (1, P))], axis=0)  # (L+1,128)
    b_post_p = jnp.tile(b_post.astype(jnp.float32), (1, P))     # (1, 16)

    kernel = functools.partial(mlp_kernel, approx_gelu=approx_gelu)

    out_p = pl.pallas_call(
        kernel,
        out_shape=jax.ShapeDtypeStruct((m_pad // P, P * N_OUTPUT), x.dtype),
        grid_spec=pltpu.PrefetchScalarGridSpec(
            num_scalar_prefetch=0,
            grid=(grid_len,),
            in_specs=[
                pl.BlockSpec((rt, P * N_INPUT), lambda i: (i, 0)),        # x
                pl.BlockSpec((P * N_INPUT, P * N_HIDDEN),
                             lambda i: (0, 0)),                           # w_pre
                pl.BlockSpec((N_LAYERS, P * N_HIDDEN, P * N_HIDDEN),
                             lambda i: (0, 0, 0)),                        # w_h
                pl.BlockSpec((P * N_HIDDEN, P * N_OUTPUT),
                             lambda i: (0, 0)),                           # w_post
                pl.BlockSpec((N_LAYERS + 1, P * N_HIDDEN),
                             lambda i: (0, 0)),                           # biases
                pl.BlockSpec((1, P * N_OUTPUT), lambda i: (0, 0)),        # b_post
            ],
            out_specs=pl.BlockSpec((rt, P * N_OUTPUT), lambda i: (i, 0)),
        ),
        compiler_params=pltpu.CompilerParams(
            dimension_semantics=("parallel",),
            vmem_limit_bytes=32 * 1024 * 1024),
    )(xp, w_pre_p, w_h_p, w_post_p, b_stack, b_post_p)

    out2d = out_p.reshape(m_pad, N_OUTPUT)[:m]
    return out2d.reshape(*lead_shape, N_OUTPUT)


# ------------------------------ init / reference ----------------------------
def init_params(key):
    """Deterministic synthetic init. Weights stored as (in, out) so the kernel
    computes y = x @ W + b (equivalent to torch's x @ W_t.T + b)."""
    ks = jax.random.split(key, 6)
    scale_pre = 1.0 / jnp.sqrt(N_INPUT)
    scale_hid = 1.0 / jnp.sqrt(N_HIDDEN)
    w_pre = jax.random.uniform(ks[0], (N_INPUT, N_HIDDEN), jnp.float32,
                               -scale_pre, scale_pre)
    b_pre = jax.random.uniform(ks[1], (1, N_HIDDEN), jnp.float32,
                               -scale_pre, scale_pre)
    w_h = jax.random.uniform(ks[2], (N_LAYERS, N_HIDDEN, N_HIDDEN), jnp.float32,
                             -scale_hid, scale_hid)
    b_h = jax.random.uniform(ks[3], (N_LAYERS, 1, N_HIDDEN), jnp.float32,
                             -scale_hid, scale_hid)
    w_post = jax.random.uniform(ks[4], (N_HIDDEN, N_OUTPUT), jnp.float32,
                                -scale_hid, scale_hid)
    b_post = jax.random.uniform(ks[5], (1, N_OUTPUT), jnp.float32,
                                -scale_hid, scale_hid)
    return (w_pre, b_pre, w_h, b_h, w_post, b_post)


def mlp_reference(x, params):
    """Pure-JAX reference of the PyTorch forward (for correctness checking)."""
    w_pre, b_pre, w_h, b_h, w_post, b_post = params
    dot = functools.partial(jnp.dot, precision=jax.lax.Precision.HIGHEST,
                            preferred_element_type=jnp.float32)
    h = _gelu(dot(x, w_pre) + b_pre[0])
    for i in range(N_LAYERS):
        z = _gelu(dot(h, w_h[i]) + b_h[i, 0])
        h = z + h if RES else z
    return dot(h, w_post) + b_post[0]


if __name__ == "__main__":
    key = jax.random.PRNGKey(0)
    k_x1, k_x2, k_p = jax.random.split(key, 3)
    params = init_params(k_p)

    # small input consistent with the module: (batch=2, seq=8, n_input=4)
    x1 = jax.random.normal(k_x1, (2, 8, N_INPUT), dtype=jnp.float32)
    out1 = jax.block_until_ready(mlp_forward(x1, params))
    ref1 = mlp_reference(x1.reshape(-1, N_INPUT), params).reshape(out1.shape)
    assert out1.shape == (2, 8, N_OUTPUT)
    assert jnp.allclose(out1, ref1, atol=1e-5, rtol=1e-4), "mismatch (small)"

    # mesh-shaped input: exercises multi-step grid, row padding, large tiles
    x2 = jax.random.normal(k_x2, (3, 40, 40, N_INPUT), dtype=jnp.float32)
    out2 = jax.block_until_ready(mlp_forward(x2, params, tm=2048))
    ref2 = mlp_reference(x2.reshape(-1, N_INPUT), params).reshape(out2.shape)
    assert out2.shape == (3, 40, 40, N_OUTPUT)
    assert jnp.allclose(out2, ref2, atol=1e-5, rtol=1e-4), "mismatch (grid)"

    print("KERNEL_OK")
</pallas_src>

<mosaic_0001>
module attributes {stable_mosaic.version = 11 : i64} {
  func.func @mlp_kernel(%arg0: i32, %arg1: memref<8x16xf32, #tpu.memory_space<vmem>>, %arg2: memref<16x128xf32, #tpu.memory_space<vmem>>, %arg3: memref<2x128x128xf32, #tpu.memory_space<vmem>>, %arg4: memref<128x16xf32, #tpu.memory_space<vmem>>, %arg5: memref<3x128xf32, #tpu.memory_space<vmem>>, %arg6: memref<1x16xf32, #tpu.memory_space<vmem>>, %arg7: memref<8x16xf32, #tpu.memory_space<vmem>>) attributes {dimension_semantics = [#tpu.dimension_semantics<parallel>], iteration_bounds = array<i64: 2>, scalar_prefetch = 0 : i64, scratch_operands = 0 : i64, tpu.core_type = #tpu.core_type<tc>, window_params = [{transform_indices = @transform_0, window_bounds = array<i64: 8, 16>}, {pipeline_mode = #tpu.pipeline_mode<synchronous>, transform_indices = @transform_1, window_bounds = array<i64: 16, 128>}, {pipeline_mode = #tpu.pipeline_mode<synchronous>, transform_indices = @transform_2, window_bounds = array<i64: 2, 128, 128>}, {pipeline_mode = #tpu.pipeline_mode<synchronous>, transform_indices = @transform_3, window_bounds = array<i64: 128, 16>}, {pipeline_mode = #tpu.pipeline_mode<synchronous>, transform_indices = @transform_4, window_bounds = array<i64: 3, 128>}, {pipeline_mode = #tpu.pipeline_mode<synchronous>, transform_indices = @transform_5, window_bounds = array<i64: 1, 16>}, {transform_indices = @transform_6, window_bounds = array<i64: 8, 16>}]} {
    %c0 = arith.constant 0 : index
    %c0_0 = arith.constant 0 : index
    %0 = vector.load %arg1[%c0, %c0_0] : memref<8x16xf32, #tpu.memory_space<vmem>>, vector<8x16xf32>
    %c0_1 = arith.constant 0 : index
    %c0_2 = arith.constant 0 : index
    %1 = vector.load %arg2[%c0_1, %c0_2] : memref<16x128xf32, #tpu.memory_space<vmem>>, vector<16x128xf32>
    %cst = arith.constant dense<0.000000e+00> : vector<8x128xf32>
    %2 = tpu.matmul %0, %1, %cst {dimension_numbers = #tpu.dot_dimension_numbers<[1], [0], [0], [1], [0, 0, 1, 1], [], []>} : vector<8x16xf32>, vector<16x128xf32>, vector<8x128xf32> -> vector<8x128xf32>
    %c0_3 = arith.constant 0 : index
    %c0_4 = arith.constant 0 : index
    %3 = vector.load %arg5[%c0_3, %c0_4] : memref<3x128xf32, #tpu.memory_space<vmem>>, vector<1x128xf32>
    %4 = vector.broadcast %3 : vector<1x128xf32> to vector<8x128xf32>
    %5 = arith.addf %2, %4 : vector<8x128xf32>
    %cst_5 = arith.constant 5.000000e-01 : f32
    %6 = vector.broadcast %cst_5 : f32 to vector<8x128xf32>
    %7 = arith.mulf %6, %5 : vector<8x128xf32>
    %cst_6 = arith.constant 0.707106769 : f32
    %8 = vector.broadcast %cst_6 : f32 to vector<8x128xf32>
    %9 = arith.mulf %5, %8 : vector<8x128xf32>
    %10 = math.erf %9 : vector<8x128xf32>
    %cst_7 = arith.constant 1.000000e+00 : f32
    %11 = vector.broadcast %cst_7 : f32 to vector<8x128xf32>
    %12 = arith.addf %11, %10 : vector<8x128xf32>
    %13 = arith.mulf %7, %12 : vector<8x128xf32>
    %c0_8 = arith.constant 0 : index
    %c0_9 = arith.constant 0 : index
    %c0_10 = arith.constant 0 : index
    %14 = vector.load %arg3[%c0_8, %c0_9, %c0_10] : memref<2x128x128xf32, #tpu.memory_space<vmem>>, vector<1x128x128xf32>
    %15 = vector.shape_cast %14 : vector<1x128x128xf32> to vector<128x128xf32>
    %cst_11 = arith.constant dense<0.000000e+00> : vector<8x128xf32>
    %16 = tpu.matmul %13, %15, %cst_11 {dimension_numbers = #tpu.dot_dimension_numbers<[1], [0], [0], [1], [0, 0, 1, 1], [], []>} : vector<8x128xf32>, vector<128x128xf32>, vector<8x128xf32> -> vector<8x128xf32>
    %c1 = arith.constant 1 : index
    %c0_12 = arith.constant 0 : index
    %17 = vector.load %arg5[%c1, %c0_12] : memref<3x128xf32, #tpu.memory_space<vmem>>, vector<1x128xf32>
    %18 = vector.broadcast %17 : vector<1x128xf32> to vector<8x128xf32>
    %19 = arith.addf %16, %18 : vector<8x128xf32>
    %cst_13 = arith.constant 5.000000e-01 : f32
    %20 = vector.broadcast %cst_13 : f32 to vector<8x128xf32>
    %21 = arith.mulf %20, %19 : vector<8x128xf32>
    %cst_14 = arith.constant 0.707106769 : f32
    %22 = vector.broadcast %cst_14 : f32 to vector<8x128xf32>
    %23 = arith.mulf %19, %22 : vector<8x128xf32>
    %24 = math.erf %23 : vector<8x128xf32>
    %cst_15 = arith.constant 1.000000e+00 : f32
    %25 = vector.broadcast %cst_15 : f32 to vector<8x128xf32>
    %26 = arith.addf %25, %24 : vector<8x128xf32>
    %27 = arith.mulf %21, %26 : vector<8x128xf32>
    %28 = arith.addf %27, %13 : vector<8x128xf32>
    %c1_16 = arith.constant 1 : index
    %c0_17 = arith.constant 0 : index
    %c0_18 = arith.constant 0 : index
    %29 = vector.load %arg3[%c1_16, %c0_17, %c0_18] : memref<2x128x128xf32, #tpu.memory_space<vmem>>, vector<1x128x128xf32>
    %30 = vector.shape_cast %29 : vector<1x128x128xf32> to vector<128x128xf32>
    %cst_19 = arith.constant dense<0.000000e+00> : vector<8x128xf32>
    %31 = tpu.matmul %28, %30, %cst_19 {dimension_numbers = #tpu.dot_dimension_numbers<[1], [0], [0], [1], [0, 0, 1, 1], [], []>} : vector<8x128xf32>, vector<128x128xf32>, vector<8x128xf32> -> vector<8x128xf32>
    %c2 = arith.constant 2 : index
    %c0_20 = arith.constant 0 : index
    %32 = vector.load %arg5[%c2, %c0_20] : memref<3x128xf32, #tpu.memory_space<vmem>>, vector<1x128xf32>
    %33 = vector.broadcast %32 : vector<1x128xf32> to vector<8x128xf32>
    %34 = arith.addf %31, %33 : vector<8x128xf32>
    %cst_21 = arith.constant 5.000000e-01 : f32
    %35 = vector.broadcast %cst_21 : f32 to vector<8x128xf32>
    %36 = arith.mulf %35, %34 : vector<8x128xf32>
    %cst_22 = arith.constant 0.707106769 : f32
    %37 = vector.broadcast %cst_22 : f32 to vector<8x128xf32>
    %38 = arith.mulf %34, %37 : vector<8x128xf32>
    %39 = math.erf %38 : vector<8x128xf32>
    %cst_23 = arith.constant 1.000000e+00 : f32
    %40 = vector.broadcast %cst_23 : f32 to vector<8x128xf32>
    %41 = arith.addf %40, %39 : vector<8x128xf32>
    %42 = arith.mulf %36, %41 : vector<8x128xf32>
    %43 = arith.addf %42, %28 : vector<8x128xf32>
    %c0_24 = arith.constant 0 : index
    %c0_25 = arith.constant 0 : index
    %44 = vector.load %arg4[%c0_24, %c0_25] : memref<128x16xf32, #tpu.memory_space<vmem>>, vector<128x16xf32>
    %cst_26 = arith.constant dense<0.000000e+00> : vector<8x16xf32>
    %45 = tpu.matmul %43, %44, %cst_26 {dimension_numbers = #tpu.dot_dimension_numbers<[1], [0], [0], [1], [0, 0, 1, 1], [], []>} : vector<8x128xf32>, vector<128x16xf32>, vector<8x16xf32> -> vector<8x16xf32>
    %c0_27 = arith.constant 0 : index
    %c0_28 = arith.constant 0 : index
    %46 = vector.load %arg6[%c0_27, %c0_28] : memref<1x16xf32, #tpu.memory_space<vmem>>, vector<1x16xf32>
    %47 = vector.broadcast %46 : vector<1x16xf32> to vector<8x16xf32>
    %48 = arith.addf %45, %47 : vector<8x16xf32>
    %c0_29 = arith.constant 0 : index
    %c0_30 = arith.constant 0 : index
    %49 = vector.load %arg7[%c0_29, %c0_30] : memref<8x16xf32, #tpu.memory_space<vmem>>, vector<8x16xf32>
    tpu.vector_store %arg7[%c0_29, %c0_30], %48 {strides = array<i32>} : memref<8x16xf32, #tpu.memory_space<vmem>>, vector<8x16xf32>,
    return
  }
  func.func @transform_0(%arg0: i32) -> (i32, i32) {
    %c0_i32 = arith.constant 0 : i32
    %c0_i32_0 = arith.constant 0 : i32
    return %arg0, %c0_i32 : i32, i32
  }
  func.func @transform_1(%arg0: i32) -> (i32, i32) {
    %c0_i32 = arith.constant 0 : i32
    %c0_i32_0 = arith.constant 0 : i32
    %c0_i32_1 = arith.constant 0 : i32
    return %c0_i32, %c0_i32_0 : i32, i32
  }
  func.func @transform_2(%arg0: i32) -> (i32, i32, i32) {
    %c0_i32 = arith.constant 0 : i32
    %c0_i32_0 = arith.constant 0 : i32
    %c0_i32_1 = arith.constant 0 : i32
    %c0_i32_2 = arith.constant 0 : i32
    return %c0_i32, %c0_i32_0, %c0_i32_1 : i32, i32, i32
  }
  func.func @transform_3(%arg0: i32) -> (i32, i32) {
    %c0_i32 = arith.constant 0 : i32
    %c0_i32_0 = arith.constant 0 : i32
    %c0_i32_1 = arith.constant 0 : i32
    return %c0_i32, %c0_i32_0 : i32, i32
  }
  func.func @transform_4(%arg0: i32) -> (i32, i32) {
    %c0_i32 = arith.constant 0 : i32
    %c0_i32_0 = arith.constant 0 : i32
    %c0_i32_1 = arith.constant 0 : i32
    return %c0_i32, %c0_i32_0 : i32, i32
  }
  func.func @transform_5(%arg0: i32) -> (i32, i32) {
    %c0_i32 = arith.constant 0 : i32
    %c0_i32_0 = arith.constant 0 : i32
    %c0_i32_1 = arith.constant 0 : i32
    return %c0_i32, %c0_i32_0 : i32, i32
  }
  func.func @transform_6(%arg0: i32) -> (i32, i32) {
    %c0_i32 = arith.constant 0 : i32
    %c0_i32_0 = arith.constant 0 : i32
    return %arg0, %c0_i32 : i32, i32
  }
}

</mosaic_0001>

<llo_original>
// kernel: tile.22
$region0: #{tile.22}
  %s0 = inlined_call_operand.vmem [shape: f32[2,4,32], index: 0, kind: input, shape index: {}]
  %s1 = inlined_call_operand.vmem [shape: f32[2,128], index: 1, kind: output, shape index: {}]
  $region1: #{tile.22} parent=0
    #allocation0 [shape = 'u8[4096]{0}', space=vmem, size = 0x1000, scoped, tag = 'scoped mem for output reshape']
    #allocation1 [shape = 'u8[8192]{0}', space=vmem, size = 0x2000, scoped, tag = 'scoped mem for input reshape']
    %s3 = sshll.u32 1, 4
    %s4 = ssub.s32 %s3, 1
    %s5 = scalar_lea.vmem %s0, 4
    %v6 = vld [vmem:[%s5] sm:%s4]
    %s7 = scalar_lea.vmem [#allocation1], 8
    %8 = vst [vmem:[%s7] sm:%s4] %v6
    %v9 = vld [vmem:[%s0] sm:%s4]
    %10 = vst [vmem:[#allocation1] sm:%s4] %v9
    %s11 = smov 3
    %v12 = vld [vmem:[#allocation1] ss:$8 sm:%s11]
    %vm13 = vcmask 261120
    %14 = vst.msk [vmem:[#allocation0] sm:$0x3] %vm13, %v12
    %s15 = scalar_lea.vmem [#allocation1], 3
    %s16 = smov 3
    %v17 = vld [vmem:[%s15] ss:$8 sm:%s16]
    %18 = vrot.lane.b32.xlu0 %v17, 96
    %v19 = vpop.permute.xlu0 %18
    %vm20 = vcmask 1048320
    %21 = vst.msk [vmem:[#allocation0] sm:$0x3] %vm20, %v19
    %s22 = scalar_lea.vmem [#allocation1], 2
    %s23 = smov 3
    %v24 = vld [vmem:[%s22] ss:$8 sm:%s23]
    %25 = vrot.lane.b32.xlu0 %v24, 64
    %v26 = vpop.permute.xlu0 %25
    %vm27 = vcmask 785920
    %28 = vst.msk [vmem:[#allocation0] sm:$0x3] %vm27, %v26
    %s29 = scalar_lea.vmem [#allocation1], 1
    %s30 = smov 3
    %v31 = vld [vmem:[%s29] ss:$8 sm:%s30]
    %32 = vrot.lane.b32.xlu0 %v31, 32
    %v33 = vpop.permute.xlu0 %32
    %vm34 = vcmask 523520
    %35 = vst.msk [vmem:[#allocation0] sm:$0x3] %vm34, %v33
    %s37 = sshll.u32 1, 2
    %s38 = ssub.s32 %s37, 1
    %v40 = vld [vmem:[#allocation0] sm:%s38]
    %s41 = sshll.u32 1, 2
    %s42 = ssub.s32 %s41, 1
    %43 = vst [vmem:[%s1] sm:%s42] %v40

// kernel: mlp_forward.1
$region0: #{mlp_forward.1}
  #allocation0 [shape = 'u32[]', space=smem, size = 0x4, offset = 0x4, fixed_abs, tag = 'smem constant byte address 0x4 - core index']
  #allocation1 [shape = 'u32[144,128]{1,0:T(1,128)}', space=vmem, size = 0x12000, scoped, tag = 'internal scratch']
  %s0 = inlined_call_operand.vmem [shape: f32[16,16], index: 0, kind: input, shape index: {}]
  %s1 = inlined_call_operand.vmem [shape: f32[16,128], index: 1, kind: input, shape index: {}]
  %s2 = inlined_call_operand.vmem [shape: f32[2,128,128], index: 2, kind: input, shape index: {}]
  %s3 = inlined_call_operand.vmem [shape: f32[128,16], index: 3, kind: input, shape index: {}]
  %s4 = inlined_call_operand.vmem [shape: f32[3,128], index: 4, kind: input, shape index: {}]
  %s5 = inlined_call_operand.vmem [shape: f32[1,16], index: 5, kind: input, shape index: {}]
  %s6 = inlined_call_operand.vmem [shape: f32[16,16], index: 6, kind: output, shape index: {}]
  %s7 = sld [smem:[#allocation0]]
  $region57: #{mlp_forward.1} parent=0
    _
  %s9 = ssub.s32 1, %s7
  %s10 = scalar_select 0, %s9, %s7
  loop: start=0, step=1, limit=4
  $region2: #{mlp_forward.1} parent=0 // loop_pre_header
    _
  $region3: #{mlp_forward.1} parent=0 // loop_header
    %s12 = sphi 0, %s16
    %p13 = scmp.ge.s32.totalorder %s12, 4
    %s22 = sphi 0, %s24
    %s25 = sphi 0, %s22
    %s26 = sphi 0, %s25
    %s42 = sphi 0, %s26
    %s46 = sphi 0, %s46
    %s48 = sphi 0, %s46
    %s49 = sphi 0, %s48
    %s63 = sphi 0, %s49
    %s67 = sphi 0, %s67
    %s69 = sphi 0, %s67
    %s70 = sphi 0, %s69
    %s84 = sphi 0, %s70
    %s88 = sphi 0, %s88
    %s90 = sphi 0, %s88
    %s91 = sphi 0, %s90
    %s105 = sphi 0, %s91
    %s109 = sphi 0, %s109
    %s111 = sphi 0, %s109
    %s112 = sphi 0, %s111
    %s126 = sphi 0, %s112
    %s130 = sphi 0, %s130
    %s132 = sphi 0, %s130
    %s133 = sphi 0, %s132
    %s147 = sphi 0, %s133
    %s153 = sphi 0, %s155
    %s156 = sphi 0, %s153
    %s157 = sphi 0, %s156
    %s173 = sphi 0, %s157
  $region4: #{mlp_forward.1} parent=0 // loop_header_branch
    %15 = sbr.rel (%p13) target = $region8
  $region5: #{mlp_forward.1} parent=0 // loop_body
    %s17 = ssub.s32 %s12, 1
    %s18 = ssub.s32 %s12, 2
    %s19 = sadd.s32 %s12, 1
    %s20 = ssub.s32 %s12, %s19
    %p21 = scmp.eq.s32.totalorder %s20, 0
    %s23 = sadd.s32 %s22, 1
    %s24 = scalar_select %p21, %s22, %s23
    %p27 = pneg %p21
    %p28 = scmp.eq.s32.totalorder %s12, 1
    %p29 = por %p27, %p28
    %p30 = scmp.ne.s32.totalorder %s22, %s25
    %p31 = scmp.eq.s32.totalorder %s12, 0
    %p32 = por %p30, %p31
    %p33 = scmp.ne.s32.totalorder %s22, %s25
    %p34 = scmp.eq.s32.totalorder %s17, 1
    %p35 = por %p33, %p34
    %p36 = scmp.ne.s32.totalorder %s25, %s26
    %p37 = scmp.eq.s32.totalorder %s17, 0
    %p38 = por %p36, %p37
    %p39 = scmp.ne.s32.totalorder %s25, %s26
    %p40 = scmp.eq.s32.totalorder %s18, 1
    %p41 = por %p39, %p40
    %p43 = scmp.ne.s32.totalorder %s26, %s42
    %p44 = scmp.eq.s32.totalorder %s18, 0
    %p45 = por %p43, %p44
    %s47 = sadd.s32 %s46, 1
    %p50 = scmp.eq.s32.totalorder %s12, 1
    %p51 = scmp.ne.s32.totalorder %s46, %s48
    %p52 = scmp.eq.s32.totalorder %s12, 0
    %p53 = por %p51, %p52
    %p54 = scmp.ne.s32.totalorder %s46, %s48
    %p55 = scmp.eq.s32.totalorder %s17, 1
    %p56 = por %p54, %p55
    %p57 = scmp.ne.s32.totalorder %s48, %s49
    %p58 = scmp.eq.s32.totalorder %s17, 0
    %p59 = por %p57, %p58
    %p60 = scmp.ne.s32.totalorder %s48, %s49
    %p61 = scmp.eq.s32.totalorder %s18, 1
    %p62 = por %p60, %p61
    %p64 = scmp.ne.s32.totalorder %s49, %s63
    %p65 = scmp.eq.s32.totalorder %s18, 0
    %p66 = por %p64, %p65
    %s68 = sadd.s32 %s67, 1
    %p71 = scmp.eq.s32.totalorder %s12, 1
    %p72 = scmp.ne.s32.totalorder %s67, %s69
    %p73 = scmp.eq.s32.totalorder %s12, 0
    %p74 = por %p72, %p73
    %p75 = scmp.ne.s32.totalorder %s67, %s69
    %p76 = scmp.eq.s32.totalorder %s17, 1
    %p77 = por %p75, %p76
    %p78 = scmp.ne.s32.totalorder %s69, %s70
    %p79 = scmp.eq.s32.totalorder %s17, 0
    %p80 = por %p78, %p79
    %p81 = scmp.ne.s32.totalorder %s69, %s70
    %p82 = scmp.eq.s32.totalorder %s18, 1
    %p83 = por %p81, %p82
    %p85 = scmp.ne.s32.totalorder %s70, %s84
    %p86 = scmp.eq.s32.totalorder %s18, 0
    %p87 = por %p85, %p86
    %s89 = sadd.s32 %s88, 1
    %p92 = scmp.eq.s32.totalorder %s12, 1
    %p93 = scmp.ne.s32.totalorder %s88, %s90
    %p94 = scmp.eq.s32.totalorder %s12, 0
    %p95 = por %p93, %p94
    %p96 = scmp.ne.s32.totalorder %s88, %s90
    %p97 = scmp.eq.s32.totalorder %s17, 1
    %p98 = por %p96, %p97
    %p99 = scmp.ne.s32.totalorder %s90, %s91
    %p100 = scmp.eq.s32.totalorder %s17, 0
    %p101 = por %p99, %p100
    %p102 = scmp.ne.s32.totalorder %s90, %s91
    %p103 = scmp.eq.s32.totalorder %s18, 1
    %p104 = por %p102, %p103
    %p106 = scmp.ne.s32.totalorder %s91, %s105
    %p107 = scmp.eq.s32.totalorder %s18, 0
    %p108 = por %p106, %p107
    %s110 = sadd.s32 %s109, 1
    %p113 = scmp.eq.s32.totalorder %s12, 1
    %p114 = scmp.ne.s32.totalorder %s109, %s111
    %p115 = scmp.eq.s32.totalorder %s12, 0
    %p116 = por %p114, %p115
    %p117 = scmp.ne.s32.totalorder %s109, %s111
    %p118 = scmp.eq.s32.totalorder %s17, 1
    %p119 = por %p117, %p118
    %p120 = scmp.ne.s32.totalorder %s111, %s112
    %p121 = scmp.eq.s32.totalorder %s17, 0
    %p122 = por %p120, %p121
    %p123 = scmp.ne.s32.totalorder %s111, %s112
    %p124 = scmp.eq.s32.totalorder %s18, 1
    %p125 = por %p123, %p124
    %p127 = scmp.ne.s32.totalorder %s112, %s126
    %p128 = scmp.eq.s32.totalorder %s18, 0
    %p129 = por %p127, %p128
    %s131 = sadd.s32 %s130, 1
    %p134 = scmp.eq.s32.totalorder %s12, 1
    %p135 = scmp.ne.s32.totalorder %s130, %s132
    %p136 = scmp.eq.s32.totalorder %s12, 0
    %p137 = por %p135, %p136
    %p138 = scmp.ne.s32.totalorder %s130, %s132
    %p139 = scmp.eq.s32.totalorder %s17, 1
    %p140 = por %p138, %p139
    %p141 = scmp.ne.s32.totalorder %s132, %s133
    %p142 = scmp.eq.s32.totalorder %s17, 0
    %p143 = por %p141, %p142
    %p144 = scmp.ne.s32.totalorder %s132, %s133
    %p145 = scmp.eq.s32.totalorder %s18, 1
    %p146 = por %p144, %p145
    %p148 = scmp.ne.s32.totalorder %s133, %s147
    %p149 = scmp.eq.s32.totalorder %s18, 0
    %p150 = por %p148, %p149
    %s151 = ssub.s32 %s12, %s19
    %p152 = scmp.eq.s32.totalorder %s151, 0
    %s154 = sadd.s32 %s153, 1
    %s155 = scalar_select %p152, %s153, %s154
    %p158 = pneg %p152
    %p159 = scmp.eq.s32.totalorder %s12, 1
    %p160 = por %p158, %p159
    %p161 = scmp.ne.s32.totalorder %s153, %s156
    %p162 = scmp.eq.s32.totalorder %s12, 0
    %p163 = por %p161, %p162
    %p164 = scmp.ne.s32.totalorder %s153, %s156
    %p165 = scmp.eq.s32.totalorder %s17, 1
    %p166 = por %p164, %p165
    %p167 = scmp.ne.s32.totalorder %s156, %s157
    %p168 = scmp.eq.s32.totalorder %s17, 0
    %p169 = por %p167, %p168
    %p170 = scmp.ne.s32.totalorder %s156, %s157
    %p171 = scmp.eq.s32.totalorder %s18, 1
    %p172 = por %p170, %p171
    %p174 = scmp.ne.s32.totalorder %s157, %s173
    %p175 = scmp.eq.s32.totalorder %s18, 0
    %p176 = por %p174, %p175
    %p177 = scmp.le.s32.totalorder 1, %s12
    %p178 = scmp.lt.s32.totalorder %s12, 3
    %p179 = pnand %p177, %p178
    %p180 = pneg %p179
    // Predicated region
    $region9: #{mlp_forward.1} parent=5 // pred_check
      _
    $region10: #{mlp_forward.1} parent=5 // pred_check_branch
      %182 = sbr.rel (%p179) target = $region12
    $region11: #{mlp_forward.1} parent=5 // pred_region
      %s183 = ssub.s32 %s12, 1
      // Predicated region
      $region13: #{mlp_forward.1} parent=11 // pred_check
        %p184 = pneg %p59
      $region14: #{mlp_forward.1} parent=11 // pred_check_branch
        %186 = sbr.rel (%p184) target = $region16
      $region15: #{mlp_forward.1} parent=11 // pred_region
        _
      $region16: #{mlp_forward.1} parent=11 // pred_fallthru
        _
      // Predicated region
      $region17: #{mlp_forward.1} parent=11 // pred_check
        %p187 = pneg %p80
      $region18: #{mlp_forward.1} parent=11 // pred_check_branch
        %189 = sbr.rel (%p187) target = $region20
      $region19: #{mlp_forward.1} parent=11 // pred_region
        _
      $region20: #{mlp_forward.1} parent=11 // pred_fallthru
        _
      // Predicated region
      $region21: #{mlp_forward.1} parent=11 // pred_check
        %p190 = pneg %p101
      $region22: #{mlp_forward.1} parent=11 // pred_check_branch
        %192 = sbr.rel (%p190) target = $region24
      $region23: #{mlp_forward.1} parent=11 // pred_region
        _
      $region24: #{mlp_forward.1} parent=11 // pred_fallthru
        _
      // Predicated region
      $region25: #{mlp_forward.1} parent=11 // pred_check
        %p193 = pneg %p122
      $region26: #{mlp_forward.1} parent=11 // pred_check_branch
        %195 = sbr.rel (%p193) target = $region28
      $region27: #{mlp_forward.1} parent=11 // pred_region
        _
      $region28: #{mlp_forward.1} parent=11 // pred_fallthru
        _
      // Predicated region
      $region29: #{mlp_forward.1} parent=11 // pred_check
        %p196 = pneg %p143
      $region30: #{mlp_forward.1} parent=11 // pred_check_branch
        %198 = sbr.rel (%p196) target = $region32
      $region31: #{mlp_forward.1} parent=11 // pred_region
        _
      $region32: #{mlp_forward.1} parent=11 // pred_fallthru
        _
    $region12: #{mlp_forward.1} parent=5 // pred_fallthru
      _
    %p199 = scmp.lt.s32.totalorder %s12, 2
    // Predicated region
    $region33: #{mlp_forward.1} parent=5 // pred_check
      %p200 = pneg %p199
    $region34: #{mlp_forward.1} parent=5 // pred_check_branch
      %202 = sbr.rel (%p200) target = $region36
    $region35: #{mlp_forward.1} parent=5 // pred_region
      // Predicated region
      $region37: #{mlp_forward.1} parent=35 // pred_check
        %p203 = pneg %p32
      $region38: #{mlp_forward.1} parent=35 // pred_check_branch
        %205 = sbr.rel (%p203) target = $region40
      $region39: #{mlp_forward.1} parent=35 // pred_region
        %p206 = scmp.lt.s32.totalorder %s12, 1
        %s207 = scalar_select %p206, %s12, 1
        %s208 = smul.addr %s207, 8
        %s209 = scalar_lea.vmem %s0, %s208
      $region40: #{mlp_forward.1} parent=35 // pred_fallthru
        _
    $region36: #{mlp_forward.1} parent=5 // pred_fallthru
      _
    %p210 = scmp.le.s32.totalorder 1, %s12
    %p211 = scmp.lt.s32.totalorder %s12, 3
    %p212 = pnand %p210, %p211
    %p213 = pneg %p212
    // Predicated region
    $region41: #{mlp_forward.1} parent=5 // pred_check
      _
    $region42: #{mlp_forward.1} parent=5 // pred_check_branch
      %215 = sbr.rel (%p212) target = $region44
    $region43: #{mlp_forward.1} parent=5 // pred_region
      %s216 = ssub.s32 %s12, 1
      %p217 = scmp.lt.s32.totalorder %s17, 1
      %s218 = scalar_select %p217, %s17, 1
      %s219 = smul.addr %s218, 8
      %s220 = scalar_lea.vmem %s0, %s219
      %p221 = pneg %p38
      %p222 = pneg %p35
      %p223 = pneg %p59
      %p224 = pneg %p56
      %p225 = pneg %p80
      %p226 = pneg %p77
      %p227 = pneg %p101
      %p228 = pneg %p98
      %p229 = pneg %p122
      %p230 = pneg %p119
      %p231 = pneg %p143
      %p232 = pneg %p140
      %p233 = pneg %p169
      %p234 = pneg %p166
      %p235 = scmp.lt.s32.totalorder %s17, 1
      %s236 = scalar_select %p235, %s17, 1
      %s237 = smul.addr %s236, 8
      %s238 = scalar_lea.vmem %s6, %s237
      %p239 = scmp.lt.s32.totalorder %s17, 1
      %s240 = scalar_select %p239, %s17, 1
      %s241 = smul.addr %s240, 8
      %s242 = scalar_lea.vmem %s0, %s241
      %p243 = scmp.lt.s32.totalorder %s17, 1
      %s244 = scalar_select %p243, %s17, 1
      %s245 = smul.addr %s244, 8
      %s246 = scalar_lea.vmem %s6, %s245
      %v247 = vld [vmem:[%s242] sm:$0xff]
      %v248 = vld [vmem:[%s1] sm:$0xff]
      %v249 = vld [vmem:[%s1 + $0x8] sm:$0xff]
      %v250 = vld [vmem:[%s4] sm:$0x1]
      %v251 = vlaneseq
      %v252 = vshrl.u32 %v251, 7
      %v253 = vsub.s32 0, %v252
      %v254 = vrot.slane %v250, %v253
      %vm255 = vcmask 130048
      %v257 = vsel %vm255, %v247, 0
      %259 = vmatprep.subr.mxu0 0.0
      %260 = vmatpush1.msra.mxu0 0.0
      %261 = vmatprep.subr.mxu0 0.0
      %262 = vmatpush1.msra.mxu0 0.0
      %263 = vmatprep.subr.mxu0 0.0
      %264 = vmatpush1.msra.mxu0 0.0
      %265 = vmatprep.subr.mxu0 0.0
      %266 = vmatpush1.msra.mxu0 0.0
      %267 = vmatprep.subr.mxu0 0.0
      %268 = vmatpush1.msra.mxu0 0.0
      %269 = vmatprep.subr.mxu0 0.0
      %270 = vmatpush1.msra.mxu0 0.0
      %271 = vmatprep.subr.mxu0 0.0
      %272 = vmatpush1.msra.mxu0 0.0
      %273 = vmatprep.subr.mxu0 0.0
      %274 = vmatpush1.msra.mxu0 0.0
      %275 = vmatprep.subr.mxu0 0.0
      %276 = vmatpush1.msra.mxu0 0.0
      %277 = vmatprep.subr.mxu0 0.0
      %278 = vmatpush1.msra.mxu0 0.0
      %279 = vmatprep.subr.mxu0 0.0
      %280 = vmatpush1.msra.mxu0 0.0
      %281 = vmatprep.subr.mxu0 0.0
      %282 = vmatpush1.msra.mxu0 0.0
      %283 = vmatprep.subr.mxu0 0.0
      %284 = vmatpush1.msra.mxu0 0.0
      %285 = vmatprep.subr.mxu0 0.0
      %286 = vmatpush1.msra.mxu0 0.0
      %287 = vmatprep.subr.mxu0 0.0
      %288 = vmatpush1.msra.mxu0 %v249
      %289 = vmatprep.subr.mxu0 0.0
      %290 = vmatpush1.msra.mxu0 %v248
      %291 = vmatprep.subr.mxu0 0.0
      %292 = vmatpush2.msra.mxu0 0.0
      %293 = vmatprep.subr.mxu0 0.0
      %294 = vmatpush2.msra.mxu0 0.0
      %295 = vmatprep.subr.mxu0 0.0
      %296 = vmatpush2.msra.mxu0 0.0
      %297 = vmatprep.subr.mxu0 0.0
      %298 = vmatpush2.msra.mxu0 0.0
      %299 = vmatprep.subr.mxu0 0.0
      %300 = vmatpush2.msra.mxu0 0.0
      %301 = vmatprep.subr.mxu0 0.0
      %302 = vmatpush2.msra.mxu0 0.0
      %303 = vmatprep.subr.mxu0 0.0
      %304 = vmatpush2.msra.mxu0 0.0
      %305 = vmatprep.subr.mxu0 0.0
      %306 = vmatpush2.msra.mxu0 0.0
      %307 = vmatprep.subr.mxu0 0.0
      %308 = vmatpush2.msra.mxu0 0.0
      %309 = vmatprep.subr.mxu0 0.0
      %310 = vmatpush2.msra.mxu0 0.0
      %311 = vmatprep.subr.mxu0 0.0
      %312 = vmatpush2.msra.mxu0 0.0
      %313 = vmatprep.subr.mxu0 0.0
      %314 = vmatpush2.msra.mxu0 0.0
      %315 = vmatprep.subr.mxu0 0.0
      %316 = vmatpush2.msra.mxu0 0.0
      %317 = vmatprep.subr.mxu0 0.0
      %318 = vmatpush2.msra.mxu0 0.0
      %319 = vmatprep.subr.mxu0 0.0
      %320 = vmatpush2.msra.mxu0 0.0
      %321 = vmatprep.subr.mxu0 0.0
      %322 = vmatpush2.msra.mxu0 0.0
      %323 = vmatprep.mubr.f32.mxu0 0.0
      %324 = vmatmul.mubr.f32.gmra.mxu0 %v257
      %v325 = vpop.f32.mrf.mxu0
      %v326 = vadd.f32 %v254, %v325
      %v327 = vpop.f32.mrf.mxu0
      %328 = vdwg.mxu0
      %v329 = vmul.f32 %v326, 0.5
      %v330 = vmul.f32 %v326, 0.70710677
      %v331 = verf.f32.pop %v330
      %v332 = vadd.f32 %v331, 1.0
      %v333 = vmul.f32 %v329, %v332
      %v334 = vld [vmem:[%s2] sm:$0xff]
      %v335 = vld [vmem:[%s2 + $0x8] sm:$0xff]
      %v336 = vld [vmem:[%s2 + $0x10] sm:$0xff]
      %v337 = vld [vmem:[%s2 + $0x18] sm:$0xff]
      %v338 = vld [vmem:[%s2 + $0x20] sm:$0xff]
      %v339 = vld [vmem:[%s2 + $0x28] sm:$0xff]
      %v340 = vld [vmem:[%s2 + $0x30] sm:$0xff]
      %v341 = vld [vmem:[%s2 + $0x38] sm:$0xff]
      %v342 = vld [vmem:[%s2 + $0x40] sm:$0xff]
      %v343 = vld [vmem:[%s2 + $0x48] sm:$0xff]
      %v344 = vld [vmem:[%s2 + $0x50] sm:$0xff]
      %v345 = vld [vmem:[%s2 + $0x58] sm:$0xff]
      %v346 = vld [vmem:[%s2 + $0x60] sm:$0xff]
      %v347 = vld [vmem:[%s2 + $0x68] sm:$0xff]
      %v348 = vld [vmem:[%s2 + $0x70] sm:$0xff]
      %v349 = vld [vmem:[%s2 + $0x78] sm:$0xff]
      %v350 = vld [vmem:[%s4 + $0x1] sm:$0x1]
      %v351 = vlaneseq
      %v352 = vshrl.u32 %v351, 7
      %v353 = vsub.s32 0, %v352
      %v354 = vrot.slane %v350, %v353
      %355 = vmatprep.subr.mxu0 0.0
      %356 = vmatpush1.msra.mxu0 %v349
      %357 = vmatprep.subr.mxu0 0.0
      %358 = vmatpush1.msra.mxu0 %v348
      %359 = vmatprep.subr.mxu0 0.0
      %360 = vmatpush1.msra.mxu0 %v347
      %361 = vmatprep.subr.mxu0 0.0
      %362 = vmatpush1.msra.mxu0 %v346
      %363 = vmatprep.subr.mxu0 0.0
      %364 = vmatpush1.msra.mxu0 %v345
      %365 = vmatprep.subr.mxu0 0.0
      %366 = vmatpush1.msra.mxu0 %v344
      %367 = vmatprep.subr.mxu0 0.0
      %368 = vmatpush1.msra.mxu0 %v343
      %369 = vmatprep.subr.mxu0 0.0
      %370 = vmatpush1.msra.mxu0 %v342
      %371 = vmatprep.subr.mxu0 0.0
      %372 = vmatpush1.msra.mxu0 %v341
      %373 = vmatprep.subr.mxu0 0.0
      %374 = vmatpush1.msra.mxu0 %v340
      %375 = vmatprep.subr.mxu0 0.0
      %376 = vmatpush1.msra.mxu0 %v339
      %377 = vmatprep.subr.mxu0 0.0
      %378 = vmatpush1.msra.mxu0 %v338
      %379 = vmatprep.subr.mxu0 0.0
      %380 = vmatpush1.msra.mxu0 %v337
      %381 = vmatprep.subr.mxu0 0.0
      %382 = vmatpush1.msra.mxu0 %v336
      %383 = vmatprep.subr.mxu0 0.0
      %384 = vmatpush1.msra.mxu0 %v335
      %385 = vmatprep.subr.mxu0 0.0
      %386 = vmatpush1.msra.mxu0 %v334
      %387 = vmatprep.subr.mxu0 0.0
      %388 = vmatpush2.msra.mxu0 0.0
      %389 = vmatprep.subr.mxu0 0.0
      %390 = vmatpush2.msra.mxu0 0.0
      %391 = vmatprep.subr.mxu0 0.0
      %392 = vmatpush2.msra.mxu0 0.0
      %393 = vmatprep.subr.mxu0 0.0
      %394 = vmatpush2.msra.mxu0 0.0
      %395 = vmatprep.subr.mxu0 0.0
      %396 = vmatpush2.msra.mxu0 0.0
      %397 = vmatprep.subr.mxu0 0.0
      %398 = vmatpush2.msra.mxu0 0.0
      %399 = vmatprep.subr.mxu0 0.0
      %400 = vmatpush2.msra.mxu0 0.0
      %401 = vmatprep.subr.mxu0 0.0
      %402 = vmatpush2.msra.mxu0 0.0
      %403 = vmatprep.subr.mxu0 0.0
      %404 = vmatpush2.msra.mxu0 0.0
      %405 = vmatprep.subr.mxu0 0.0
      %406 = vmatpush2.msra.mxu0 0.0
      %407 = vmatprep.subr.mxu0 0.0
      %408 = vmatpush2.msra.mxu0 0.0
      %409 = vmatprep.subr.mxu0 0.0
      %410 = vmatpush2.msra.mxu0 0.0
      %411 = vmatprep.subr.mxu0 0.0
      %412 = vmatpush2.msra.mxu0 0.0
      %413 = vmatprep.subr.mxu0 0.0
      %414 = vmatpush2.msra.mxu0 0.0
      %415 = vmatprep.subr.mxu0 0.0
      %416 = vmatpush2.msra.mxu0 0.0
      %417 = vmatprep.subr.mxu0 0.0
      %418 = vmatpush2.msra.mxu0 0.0
      %419 = vmatprep.mubr.f32.mxu0 0.0
      %420 = vmatmul.mubr.f32.gmra.mxu0 %v333
      %v421 = vpop.f32.mrf.mxu0
      %v422 = vadd.f32 %v354, %v421
      %v423 = vpop.f32.mrf.mxu0
      %424 = vdwg.mxu0
      %v425 = vmul.f32 %v422, 0.5
      %v426 = vmul.f32 %v422, 0.70710677
      %v427 = verf.f32.pop %v426
      %v428 = vadd.f32 %v427, 1.0
      %v429 = vmul.f32 %v425, %v428
      %v430 = vadd.f32 %v429, %v333
      %s431 = scalar_lea.vmem %s2, 128
      %v432 = vld [vmem:[%s431] sm:$0xff]
      %v433 = vld [vmem:[%s431 + $0x8] sm:$0xff]
      %v434 = vld [vmem:[%s431 + $0x10] sm:$0xff]
      %v435 = vld [vmem:[%s431 + $0x18] sm:$0xff]
      %v436 = vld [vmem:[%s431 + $0x20] sm:$0xff]
      %v437 = vld [vmem:[%s431 + $0x28] sm:$0xff]
      %v438 = vld [vmem:[%s431 + $0x30] sm:$0xff]
      %v439 = vld [vmem:[%s431 + $0x38] sm:$0xff]
      %v440 = vld [vmem:[%s431 + $0x40] sm:$0xff]
      %v441 = vld [vmem:[%s431 + $0x48] sm:$0xff]
      %v442 = vld [vmem:[%s431 + $0x50] sm:$0xff]
      %v443 = vld [vmem:[%s431 + $0x58] sm:$0xff]
      %v444 = vld [vmem:[%s431 + $0x60] sm:$0xff]
      %v445 = vld [vmem:[%s431 + $0x68] sm:$0xff]
      %v446 = vld [vmem:[%s431 + $0x70] sm:$0xff]
      %v447 = vld [vmem:[%s431 + $0x78] sm:$0xff]
      %v448 = vld [vmem:[%s4 + $0x2] sm:$0x1]
      %v449 = vlaneseq
      %v450 = vshrl.u32 %v449, 7
      %v451 = vsub.s32 0, %v450
      %v452 = vrot.slane %v448, %v451
      %453 = vmatprep.subr.mxu0 0.0
      %454 = vmatpush1.msra.mxu0 %v447
      %455 = vmatprep.subr.mxu0 0.0
      %456 = vmatpush1.msra.mxu0 %v446
      %457 = vmatprep.subr.mxu0 0.0
      %458 = vmatpush1.msra.mxu0 %v445
      %459 = vmatprep.subr.mxu0 0.0
      %460 = vmatpush1.msra.mxu0 %v444
      %461 = vmatprep.subr.mxu0 0.0
      %462 = vmatpush1.msra.mxu0 %v443
      %463 = vmatprep.subr.mxu0 0.0
      %464 = vmatpush1.msra.mxu0 %v442
      %465 = vmatprep.subr.mxu0 0.0
      %466 = vmatpush1.msra.mxu0 %v441
      %467 = vmatprep.subr.mxu0 0.0
      %468 = vmatpush1.msra.mxu0 %v440
      %469 = vmatprep.subr.mxu0 0.0
      %470 = vmatpush1.msra.mxu0 %v439
      %471 = vmatprep.subr.mxu0 0.0
      %472 = vmatpush1.msra.mxu0 %v438
      %473 = vmatprep.subr.mxu0 0.0
      %474 = vmatpush1.msra.mxu0 %v437
      %475 = vmatprep.subr.mxu0 0.0
      %476 = vmatpush1.msra.mxu0 %v436
      %477 = vmatprep.subr.mxu0 0.0
      %478 = vmatpush1.msra.mxu0 %v435
      %479 = vmatprep.subr.mxu0 0.0
      %480 = vmatpush1.msra.mxu0 %v434
      %481 = vmatprep.subr.mxu0 0.0
      %482 = vmatpush1.msra.mxu0 %v433
      %483 = vmatprep.subr.mxu0 0.0
      %484 = vmatpush1.msra.mxu0 %v432
      %485 = vmatprep.subr.mxu0 0.0
      %486 = vmatpush2.msra.mxu0 0.0
      %487 = vmatprep.subr.mxu0 0.0
      %488 = vmatpush2.msra.mxu0 0.0
      %489 = vmatprep.subr.mxu0 0.0
      %490 = vmatpush2.msra.mxu0 0.0
      %491 = vmatprep.subr.mxu0 0.0
      %492 = vmatpush2.msra.mxu0 0.0
      %493 = vmatprep.subr.mxu0 0.0
      %494 = vmatpush2.msra.mxu0 0.0
      %495 = vmatprep.subr.mxu0 0.0
      %496 = vmatpush2.msra.mxu0 0.0
      %497 = vmatprep.subr.mxu0 0.0
      %498 = vmatpush2.msra.mxu0 0.0
      %499 = vmatprep.subr.mxu0 0.0
      %500 = vmatpush2.msra.mxu0 0.0
      %501 = vmatprep.subr.mxu0 0.0
      %502 = vmatpush2.msra.mxu0 0.0
      %503 = vmatprep.subr.mxu0 0.0
      %504 = vmatpush2.msra.mxu0 0.0
      %505 = vmatprep.subr.mxu0 0.0
      %506 = vmatpush2.msra.mxu0 0.0
      %507 = vmatprep.subr.mxu0 0.0
      %508 = vmatpush2.msra.mxu0 0.0
      %509 = vmatprep.subr.mxu0 0.0
      %510 = vmatpush2.msra.mxu0 0.0
      %511 = vmatprep.subr.mxu0 0.0
      %512 = vmatpush2.msra.mxu0 0.0
      %513 = vmatprep.subr.mxu0 0.0
      %514 = vmatpush2.msra.mxu0 0.0
      %515 = vmatprep.subr.mxu0 0.0
      %516 = vmatpush2.msra.mxu0 0.0
      %517 = vmatprep.mubr.f32.mxu0 0.0
      %518 = vmatmul.mubr.f32.gmra.mxu0 %v430
      %v519 = vpop.f32.mrf.mxu0
      %v520 = vadd.f32 %v452, %v519
      %v521 = vpop.f32.mrf.mxu0
      %522 = vdwg.mxu0
      %v523 = vmul.f32 %v520, 0.5
      %v524 = vmul.f32 %v520, 0.70710677
      %v525 = verf.f32.pop %v524
      %v526 = vadd.f32 %v525, 1.0
      %v527 = vmul.f32 %v523, %v526
      %v528 = vadd.f32 %v527, %v430
      %v529 = vld [vmem:[%s3] sm:$0xff]
      %v530 = vld [vmem:[%s3 + $0x8] sm:$0xff]
      %v531 = vld [vmem:[%s3 + $0x10] sm:$0xff]
      %v532 = vld [vmem:[%s3 + $0x18] sm:$0xff]
      %v533 = vld [vmem:[%s3 + $0x20] sm:$0xff]
      %v534 = vld [vmem:[%s3 + $0x28] sm:$0xff]
      %v535 = vld [vmem:[%s3 + $0x30] sm:$0xff]
      %v536 = vld [vmem:[%s3 + $0x38] sm:$0xff]
      %v537 = vld [vmem:[%s3 + $0x40] sm:$0xff]
      %v538 = vld [vmem:[%s3 + $0x48] sm:$0xff]
      %v539 = vld [vmem:[%s3 + $0x50] sm:$0xff]
      %v540 = vld [vmem:[%s3 + $0x58] sm:$0xff]
      %v541 = vld [vmem:[%s3 + $0x60] sm:$0xff]
      %v542 = vld [vmem:[%s3 + $0x68] sm:$0xff]
      %v543 = vld [vmem:[%s3 + $0x70] sm:$0xff]
      %v544 = vld [vmem:[%s3 + $0x78] sm:$0xff]
      %v545 = vld [vmem:[%s5] sm:$0x1]
      %v547 = vlaneseq
      %v548 = vshrl.u32 %v547, 7
      %v549 = vsub.s32 0, %v548
      %v550 = vrot.slane %v545, %v549
      %552 = vmatprep.subr.mxu0 0.0
      %553 = vmatpush1.msra.mxu0 %v544
      %554 = vmatprep.subr.mxu0 0.0
      %555 = vmatpush1.msra.mxu0 %v543
      %556 = vmatprep.subr.mxu0 0.0
      %557 = vmatpush1.msra.mxu0 %v542
      %558 = vmatprep.subr.mxu0 0.0
      %559 = vmatpush1.msra.mxu0 %v541
      %560 = vmatprep.subr.mxu0 0.0
      %561 = vmatpush1.msra.mxu0 %v540
      %562 = vmatprep.subr.mxu0 0.0
      %563 = vmatpush1.msra.mxu0 %v539
      %564 = vmatprep.subr.mxu0 0.0
      %565 = vmatpush1.msra.mxu0 %v538
      %566 = vmatprep.subr.mxu0 0.0
      %567 = vmatpush1.msra.mxu0 %v537
      %568 = vmatprep.subr.mxu0 0.0
      %569 = vmatpush1.msra.mxu0 %v536
      %570 = vmatprep.subr.mxu0 0.0
      %571 = vmatpush1.msra.mxu0 %v535
      %572 = vmatprep.subr.mxu0 0.0
      %573 = vmatpush1.msra.mxu0 %v534
      %574 = vmatprep.subr.mxu0 0.0
      %575 = vmatpush1.msra.mxu0 %v533
      %576 = vmatprep.subr.mxu0 0.0
      %577 = vmatpush1.msra.mxu0 %v532
      %578 = vmatprep.subr.mxu0 0.0
      %579 = vmatpush1.msra.mxu0 %v531
      %580 = vmatprep.subr.mxu0 0.0
      %581 = vmatpush1.msra.mxu0 %v530
      %582 = vmatprep.subr.mxu0 0.0
      %583 = vmatpush1.msra.mxu0 %v529
      %584 = vmatprep.subr.mxu0 0.0
      %585 = vmatpush2.msra.mxu0 0.0
      %586 = vmatprep.subr.mxu0 0.0
      %587 = vmatpush2.msra.mxu0 0.0
      %588 = vmatprep.subr.mxu0 0.0
      %589 = vmatpush2.msra.mxu0 0.0
      %590 = vmatprep.subr.mxu0 0.0
      %591 = vmatpush2.msra.mxu0 0.0
      %592 = vmatprep.subr.mxu0 0.0
      %593 = vmatpush2.msra.mxu0 0.0
      %594 = vmatprep.subr.mxu0 0.0
      %595 = vmatpush2.msra.mxu0 0.0
      %596 = vmatprep.subr.mxu0 0.0
      %597 = vmatpush2.msra.mxu0 0.0
      %598 = vmatprep.subr.mxu0 0.0
      %599 = vmatpush2.msra.mxu0 0.0
      %600 = vmatprep.subr.mxu0 0.0
      %601 = vmatpush2.msra.mxu0 0.0
      %602 = vmatprep.subr.mxu0 0.0
      %603 = vmatpush2.msra.mxu0 0.0
      %604 = vmatprep.subr.mxu0 0.0
      %605 = vmatpush2.msra.mxu0 0.0
      %606 = vmatprep.subr.mxu0 0.0
      %607 = vmatpush2.msra.mxu0 0.0
      %608 = vmatprep.subr.mxu0 0.0
      %609 = vmatpush2.msra.mxu0 0.0
      %610 = vmatprep.subr.mxu0 0.0
      %611 = vmatpush2.msra.mxu0 0.0
      %612 = vmatprep.subr.mxu0 0.0
      %613 = vmatpush2.msra.mxu0 0.0
      %614 = vmatprep.subr.mxu0 0.0
      %615 = vmatpush2.msra.mxu0 0.0
      %616 = vmatprep.mubr.f32.mxu0 0.0
      %617 = vmatmul.mubr.f32.gmra.mxu0 %v528
      %v618 = vpop.f32.mrf.mxu0
      %v619 = vadd.f32 %v550, %v618
      %v620 = vpop.f32.mrf.mxu0
      %621 = vdwg.mxu0
      %622 = vst.msk [vmem:[%s246] sm:$0xff] %vm255, %v619
      %p623 = scmp.lt.s32.totalorder %s17, 1
      %s624 = scalar_select %p623, %s17, 1
      %s625 = smul.addr %s624, 8
      %s626 = scalar_lea.vmem %s6, %s625
      // Predicated region
      $region45: #{mlp_forward.1} parent=43 // pred_check
        %p627 = pneg %p166
      $region46: #{mlp_forward.1} parent=43 // pred_check_branch
        %629 = sbr.rel (%p627) target = $region48
      $region47: #{mlp_forward.1} parent=43 // pred_region
        _
      $region48: #{mlp_forward.1} parent=43 // pred_fallthru
        _
    $region44: #{mlp_forward.1} parent=5 // pred_fallthru
      _
    %p630 = scmp.le.s32.totalorder 2, %s12
    // Predicated region
    $region49: #{mlp_forward.1} parent=5 // pred_check
      %p631 = pneg %p630
    $region50: #{mlp_forward.1} parent=5 // pred_check_branch
      %633 = sbr.rel (%p631) target = $region52
    $region51: #{mlp_forward.1} parent=5 // pred_region
      %s634 = ssub.s32 %s12, 2
      // Predicated region
      $region53: #{mlp_forward.1} parent=51 // pred_check
        %p635 = pneg %p172
      $region54: #{mlp_forward.1} parent=51 // pred_check_branch
        %637 = sbr.rel (%p635) target = $region56
      $region55: #{mlp_forward.1} parent=51 // pred_region
        %p638 = scmp.lt.s32.totalorder %s18, 1
        %s639 = scalar_select %p638, %s18, 1
        %s640 = smul.addr %s639, 8
        %s641 = scalar_lea.vmem %s6, %s640
      $region56: #{mlp_forward.1} parent=51 // pred_fallthru
        _
    $region52: #{mlp_forward.1} parent=5 // pred_fallthru
      _
  $region6: #{mlp_forward.1} parent=0 // loop_footer
    %s16 = sadd.s32 1, %s12
  $region7: #{mlp_forward.1} parent=0 // loop_footer_branch
    %11 = sbr.rel target = $region3
  $region8: #{mlp_forward.1} parent=0 // loop_exit
    _

</llo_original>
